<compile_context>
chip_gen: v7x
topology: tpu7x:2x2x1
jax: 0.10.0
libtpu: 0.0.40
codegen_flags: <defaults>
</compile_context>

<pallas_src>
import jax
import jax.numpy as jnp
from jax.experimental import pallas as pl
from jax.experimental.pallas import tpu as pltpu


_LANES = 128
_TARGET_BLOCK_BYTES = 4 * 1024 * 1024   # ~4 MiB of input per grid step
_MIN_SPLIT_BYTES = 1 * 1024 * 1024      # force >=2 blocks above this (v7x megacore)


def _to_bf16_kernel(x_ref, o_ref):
    # Single cast of the source-dtype tile to bf16: one VPU convert per vreg,
    # no extra bf16 arithmetic (so no f32<->bf16 round-trips on v5e's VPU).
    o_ref[...] = x_ref[...].astype(jnp.bfloat16)


def _choose_cols(n):
    # Widest lane dimension (multiple of 128) dividing n exactly: pad-free
    # reshape and unmasked, lane-dense output stores.
    for c in (8192, 4096, 2048, 1024, 512, 256, 128):
        if n % c == 0:
            return c
    return _LANES  # awkward size: small (<128-element) tail pad handled below


def to_bf16_copy(x):
    """Elementwise cast to bfloat16 (equivalent of x.to(torch.bfloat16))."""
    if x.dtype == jnp.bfloat16:
        # No-op cast: skip the full read+write HBM pass entirely.
        return x

    orig_shape = x.shape
    n = x.size
    if n == 0:
        return x.astype(jnp.bfloat16)

    flat = x.reshape(-1)
    itemsize = jnp.dtype(x.dtype).itemsize

    # --- lane-dense 2-D view -------------------------------------------------
    cols = _choose_cols(n)
    rows = pl.cdiv(n, cols)
    n2d = rows * cols
    if n2d != n:
        # Only reached when n % 128 != 0: pad the (<128-element) tail so the
        # flat array reshapes to (rows, cols). Common shapes take the
        # pad-free path above.
        flat = jnp.pad(flat, (0, n2d - n))
    x2d = flat.reshape(rows, cols)

    # --- block sizing ----------------------------------------------------------
    # ~4 MiB of input per grid step; block_rows a multiple of 16 (bf16 output
    # sublane packing) unless the block spans the full row extent.
    br = _TARGET_BLOCK_BYTES // (cols * itemsize)
    br = max(16, (br // 16) * 16)
    if rows > 16 and rows * cols * itemsize >= _MIN_SPLIT_BYTES:
        # Guarantee at least 2 blocks so the "parallel" grid axis can shard
        # across v7x's two TensorCores (harmless extra step on v5e/v6e).
        half_rows = -(-rows // 2)
        br = min(br, max(16, -(-half_rows // 16) * 16))
    block_rows = min(rows, br)
    # Non-divisible grids are fine: Pallas masks the partial last block's
    # writes, so no rows padding / trailing slice (no extra HBM passes).
    n_blocks = pl.cdiv(rows, block_rows)

    out2d = pl.pallas_call(
        _to_bf16_kernel,
        out_shape=jax.ShapeDtypeStruct((rows, cols), jnp.bfloat16),
        grid=(n_blocks,),
        in_specs=[pl.BlockSpec((block_rows, cols), lambda i: (i, 0))],
        out_specs=pl.BlockSpec((block_rows, cols), lambda i: (i, 0)),
        compiler_params=pltpu.CompilerParams(
            dimension_semantics=("parallel",),
        ),
        cost_estimate=pl.CostEstimate(
            flops=0,
            transcendentals=0,
            bytes_accessed=n * itemsize + n * 2,
        ),
    )(x2d)

    out = out2d.reshape(-1)
    if n2d != n:
        out = out[:n]
    return out.reshape(orig_shape)


if __name__ == "__main__":
    key = jax.random.PRNGKey(0)
    # NCHW input, small shape: batch=2, channels=4, spatial=16x16
    x = jax.random.normal(key, (2, 4, 16, 16), dtype=jnp.float32)

    y = to_bf16_copy(x)
    y = jax.block_until_ready(y)

    ref = x.astype(jnp.bfloat16)
    assert y.dtype == jnp.bfloat16, y.dtype
    assert y.shape == x.shape, y.shape
    assert jnp.array_equal(y, ref), "mismatch vs reference"

    print("KERNEL_OK")
</pallas_src>

<mosaic_0001>
module attributes {stable_mosaic.version = 11 : i64} {
  func.func @_to_bf16_kernel(%arg0: i32, %arg1: memref<1x2048xf32, #tpu.memory_space<vmem>>, %arg2: memref<1x2048xbf16, #tpu.memory_space<vmem>>) attributes {dimension_semantics = [#tpu.dimension_semantics<parallel>], iteration_bounds = array<i64: 1>, scalar_prefetch = 0 : i64, scratch_operands = 0 : i64, tpu.core_type = #tpu.core_type<tc>, window_params = [{transform_indices = @transform_0, window_bounds = array<i64: 1, 2048>}, {transform_indices = @transform_1, window_bounds = array<i64: 1, 2048>}]} {
    %c0 = arith.constant 0 : index
    %c0_0 = arith.constant 0 : index
    %0 = vector.load %arg1[%c0, %c0_0] : memref<1x2048xf32, #tpu.memory_space<vmem>>, vector<1x2048xf32>
    %1 = arith.truncf %0 : vector<1x2048xf32> to vector<1x2048xbf16>
    %c0_1 = arith.constant 0 : index
    %c0_2 = arith.constant 0 : index
    %2 = vector.load %arg2[%c0_1, %c0_2] : memref<1x2048xbf16, #tpu.memory_space<vmem>>, vector<1x2048xbf16>
    tpu.vector_store %arg2[%c0_1, %c0_2], %1 {strides = array<i32>} : memref<1x2048xbf16, #tpu.memory_space<vmem>>, vector<1x2048xbf16>,
    return
  }
  func.func @transform_0(%arg0: i32) -> (i32, i32) {
    %c0_i32 = arith.constant 0 : i32
    %c0_i32_0 = arith.constant 0 : i32
    return %arg0, %c0_i32 : i32, i32
  }
  func.func @transform_1(%arg0: i32) -> (i32, i32) {
    %c0_i32 = arith.constant 0 : i32
    %c0_i32_0 = arith.constant 0 : i32
    return %arg0, %c0_i32 : i32, i32
  }
}

</mosaic_0001>

<llo_original>
// kernel: tpu_custom_call.1
$region0: #{tpu_custom_call.1}
  #allocation0 [shape = 'u32[]', space=smem, size = 0x4, offset = 0x4, fixed_abs, tag = 'smem constant byte address 0x4 - core index']
  #allocation1 [shape = 'u32[144,128]{1,0:T(1,128)}', space=vmem, size = 0x12000, scoped, tag = 'internal scratch']
  %s0 = inlined_call_operand.hbm [shape: f32[1,2048], index: 0, kind: input, shape index: {}]
  %s1 = inlined_call_operand.hbm [shape: bf16[1,2048], index: 1, kind: output, shape index: {}]
  %s2 = sld [smem:[#allocation0]]
  $region18: #{tpu_custom_call.1} parent=0
    _
  %s4 = ssub.s32 1, %s2
  %s5 = scalar_select 0, %s4, %s2
  $region1: #{tpu_custom_call.1} parent=0
    #allocation2 [shape = 'u8[8192]{0}', space=vmem, size = 0x2000, scoped, tag = 'input window, operand 0, single buffered']
    #allocation3 [shape = 's32[1]{0}', space=sflag, size = 0x4, scoped, tag = 'scoped memory for tpu_custom_call.1']
    #allocation4 [shape = 's32[1]{0}', space=sflag, size = 0x4, scoped, tag = 'scoped memory for tpu_custom_call.1']
    #allocation5 [shape = 'u8[8192]{0}', space=vmem, size = 0x2000, scoped, tag = 'output window, operand 0, single buffered']
    %6 = vsyncpa [#allocation3], 0
    %7 = vsyncpa [#allocation4], 0
    // Predicated region
    $region2: #{tpu_custom_call.1} parent=1 // pred_check
      _
    $region3: #{tpu_custom_call.1} parent=1 // pred_check_branch
      %9 = sbr.rel (0) target = $region5
    $region4: #{tpu_custom_call.1} parent=1 // pred_region
      %s11 = ssub.s32 256, 256
      %12 = vsyncadd [#allocation3], %s11
      %s14 = sshll.u32 [#allocation2], 4
      %s15 = int_to_ptr.vmem [resolvable:$true] %s14
      %17 = dma.hbm_to_vmem [thread:$0]  %s0, 256, %s15, [#allocation3]
    $region5: #{tpu_custom_call.1} parent=1 // pred_fallthru
      _
    // Predicated region
    $region6: #{tpu_custom_call.1} parent=1 // pred_check
      _
    $region7: #{tpu_custom_call.1} parent=1 // pred_check_branch
      %19 = sbr.rel (0) target = $region9
    $region8: #{tpu_custom_call.1} parent=1 // pred_region
      %20 = dma.done [#allocation3], 256
    $region9: #{tpu_custom_call.1} parent=1 // pred_fallthru
      _
    %v21 = vld [vmem:[#allocation2] sm:$0xff]
    %v22 = vld [vmem:[#allocation2 + $0x8] sm:$0xff]
    %v25 = vlaneseq
    %v26 = vshrl.u32 %v25, 7
    %v27 = vsub.s32 0, %v26
    %v28 = vrot.slane %v21, %v27
    %v29 = vlaneseq
    %v30 = vshrl.u32 %v29, 7
    %v31 = vsub.s32 1, %v30
    %v32 = vrot.slane %v21, %v31
    %v33 = vlaneseq
    %v34 = vshrl.u32 %v33, 7
    %v35 = vsub.s32 2, %v34
    %v36 = vrot.slane %v21, %v35
    %v37 = vlaneseq
    %v38 = vshrl.u32 %v37, 7
    %v39 = vsub.s32 3, %v38
    %v40 = vrot.slane %v21, %v39
    %v41 = vlaneseq
    %v42 = vshrl.u32 %v41, 7
    %v43 = vsub.s32 4, %v42
    %v44 = vrot.slane %v21, %v43
    %v45 = vlaneseq
    %v46 = vshrl.u32 %v45, 7
    %v47 = vsub.s32 5, %v46
    %v48 = vrot.slane %v21, %v47
    %v49 = vlaneseq
    %v50 = vshrl.u32 %v49, 7
    %v51 = vsub.s32 6, %v50
    %v52 = vrot.slane %v21, %v51
    %v53 = vlaneseq
    %v54 = vshrl.u32 %v53, 7
    %v55 = vsub.s32 7, %v54
    %v56 = vrot.slane %v21, %v55
    %v57 = vlaneseq
    %v58 = vshrl.u32 %v57, 7
    %v59 = vsub.s32 0, %v58
    %v60 = vrot.slane %v22, %v59
    %v61 = vlaneseq
    %v62 = vshrl.u32 %v61, 7
    %v63 = vsub.s32 1, %v62
    %v64 = vrot.slane %v22, %v63
    %v65 = vlaneseq
    %v66 = vshrl.u32 %v65, 7
    %v67 = vsub.s32 2, %v66
    %v68 = vrot.slane %v22, %v67
    %v69 = vlaneseq
    %v70 = vshrl.u32 %v69, 7
    %v71 = vsub.s32 3, %v70
    %v72 = vrot.slane %v22, %v71
    %v73 = vlaneseq
    %v74 = vshrl.u32 %v73, 7
    %v75 = vsub.s32 4, %v74
    %v76 = vrot.slane %v22, %v75
    %v77 = vlaneseq
    %v78 = vshrl.u32 %v77, 7
    %v79 = vsub.s32 5, %v78
    %v80 = vrot.slane %v22, %v79
    %v81 = vlaneseq
    %v82 = vshrl.u32 %v81, 7
    %v83 = vsub.s32 6, %v82
    %v84 = vrot.slane %v22, %v83
    %v85 = vlaneseq
    %v86 = vshrl.u32 %v85, 7
    %v87 = vsub.s32 7, %v86
    %v88 = vrot.slane %v22, %v87
    %v105 = vpack.c.bf16 %v28, %v28
    %v106 = vpack.c.bf16 %v32, %v32
    %v107 = vpack.c.bf16 %v36, %v36
    %v108 = vpack.c.bf16 %v40, %v40
    %v109 = vpack.c.bf16 %v44, %v44
    %v110 = vpack.c.bf16 %v48, %v48
    %v111 = vpack.c.bf16 %v52, %v52
    %v112 = vpack.c.bf16 %v56, %v56
    %v113 = vpack.c.bf16 %v60, %v60
    %v114 = vpack.c.bf16 %v64, %v64
    %v115 = vpack.c.bf16 %v68, %v68
    %v116 = vpack.c.bf16 %v72, %v72
    %v117 = vpack.c.bf16 %v76, %v76
    %v118 = vpack.c.bf16 %v80, %v80
    %v119 = vpack.c.bf16 %v84, %v84
    %v120 = vpack.c.bf16 %v88, %v88
    %v137 = vcombine.low %v105, %v106
    %v138 = vcombine.low %v107, %v108
    %v139 = vcombine.low %v109, %v110
    %v140 = vcombine.low %v111, %v112
    %v142 = vunpack.c.l.s4 1966171168
    %v143 = vunpack.c.0.s8 %v142
    %v144 = vlaneseq
    %v145 = vshrl.u32 %v144, 7
    %v146 = vsub.s32 %v143, %v145
    %v147 = vrot.slane %v137, %v146
    %v149 = vunpack.c.l.s4 1966171168
    %v150 = vunpack.c.0.s8 %v149
    %v151 = vlaneseq
    %v152 = vshrl.u32 %v151, 7
    %v153 = vsub.s32 %v150, %v152
    %v154 = vrot.slane %v138, %v153
    %v156 = vunpack.c.l.s4 1966171168
    %v157 = vunpack.c.0.s8 %v156
    %v158 = vlaneseq
    %v159 = vshrl.u32 %v158, 7
    %v160 = vsub.s32 %v157, %v159
    %v161 = vrot.slane %v139, %v160
    %v163 = vunpack.c.l.s4 1966171168
    %v164 = vunpack.c.0.s8 %v163
    %v165 = vlaneseq
    %v166 = vshrl.u32 %v165, 7
    %v167 = vsub.s32 %v164, %v166
    %v168 = vrot.slane %v140, %v167
    %v169 = vcombine.low %v147, %v154
    %v170 = vcombine.low %v161, %v168
    %v172 = vunpack.c.l.s4 1966171168
    %v173 = vunpack.c.0.s8 %v172
    %v174 = vlaneseq
    %v175 = vshrl.u32 %v174, 7
    %v176 = vsub.s32 %v173, %v175
    %v177 = vrot.slane %v169, %v176
    %v179 = vunpack.c.l.s4 1966171168
    %v180 = vunpack.c.0.s8 %v179
    %v181 = vlaneseq
    %v182 = vshrl.u32 %v181, 7
    %v183 = vsub.s32 %v180, %v182
    %v184 = vrot.slane %v170, %v183
    %v185 = vcombine.low %v177, %v184
    %v186 = vcombine.low %v113, %v114
    %v187 = vcombine.low %v115, %v116
    %v188 = vcombine.low %v117, %v118
    %v189 = vcombine.low %v119, %v120
    %v191 = vunpack.c.l.s4 1966171168
    %v192 = vunpack.c.0.s8 %v191
    %v193 = vlaneseq
    %v194 = vshrl.u32 %v193, 7
    %v195 = vsub.s32 %v192, %v194
    %v196 = vrot.slane %v186, %v195
    %v198 = vunpack.c.l.s4 1966171168
    %v199 = vunpack.c.0.s8 %v198
    %v200 = vlaneseq
    %v201 = vshrl.u32 %v200, 7
    %v202 = vsub.s32 %v199, %v201
    %v203 = vrot.slane %v187, %v202
    %v205 = vunpack.c.l.s4 1966171168
    %v206 = vunpack.c.0.s8 %v205
    %v207 = vlaneseq
    %v208 = vshrl.u32 %v207, 7
    %v209 = vsub.s32 %v206, %v208
    %v210 = vrot.slane %v188, %v209
    %v212 = vunpack.c.l.s4 1966171168
    %v213 = vunpack.c.0.s8 %v212
    %v214 = vlaneseq
    %v215 = vshrl.u32 %v214, 7
    %v216 = vsub.s32 %v213, %v215
    %v217 = vrot.slane %v189, %v216
    %v218 = vcombine.low %v196, %v203
    %v219 = vcombine.low %v210, %v217
    %v221 = vunpack.c.l.s4 1966171168
    %v222 = vunpack.c.0.s8 %v221
    %v223 = vlaneseq
    %v224 = vshrl.u32 %v223, 7
    %v225 = vsub.s32 %v222, %v224
    %v226 = vrot.slane %v218, %v225
    %v228 = vunpack.c.l.s4 1966171168
    %v229 = vunpack.c.0.s8 %v228
    %v230 = vlaneseq
    %v231 = vshrl.u32 %v230, 7
    %v232 = vsub.s32 %v229, %v231
    %v233 = vrot.slane %v219, %v232
    %v234 = vcombine.low %v226, %v233
    %vm237 = vcmask 1040384
    %vm238 = vsmask.f32 256
    %vm239 = vmand %vm237, %vm238
    %vm240 = vcmask 1041409
    %vm241 = vsmask.f32 1280
    %vm242 = vmand %vm240, %vm241
    %vm243 = vmor %vm242, %vm239
    %vm244 = vcmask 1042434
    %vm245 = vsmask.f32 2304
    %vm246 = vmand %vm244, %vm245
    %vm247 = vmor %vm246, %vm243
    %vm248 = vcmask 1043459
    %vm249 = vsmask.f32 3328
    %vm250 = vmand %vm248, %vm249
    %vm251 = vmor %vm250, %vm247
    %vm252 = vcmask 1044484
    %vm253 = vsmask.f32 4352
    %vm254 = vmand %vm252, %vm253
    %vm255 = vmor %vm254, %vm251
    %vm256 = vcmask 1045509
    %vm257 = vsmask.f32 5376
    %vm258 = vmand %vm256, %vm257
    %vm259 = vmor %vm258, %vm255
    %vm260 = vcmask 1046534
    %vm261 = vsmask.f32 6400
    %vm262 = vmand %vm260, %vm261
    %vm263 = vmor %vm262, %vm259
    %vm264 = vcmask 1047559
    %vm265 = vsmask.f32 7424
    %vm266 = vmand %vm264, %vm265
    %vm267 = vmor %vm266, %vm263
    %v268 = vld [vmem:[#allocation5] sm:$0xff]
    %v269 = vsel %vm267, %v185, %v268
    %270 = vst [vmem:[#allocation5] sm:$0xff] %v269
    %v271 = vld [vmem:[#allocation5 + $0x8] sm:$0xff]
    %v272 = vsel %vm267, %v234, %v271
    %273 = vst [vmem:[#allocation5 + $0x8] sm:$0xff] %v272
    // Predicated region
    $region10: #{tpu_custom_call.1} parent=1 // pred_check
      _
    $region11: #{tpu_custom_call.1} parent=1 // pred_check_branch
      %275 = sbr.rel (0) target = $region13
    $region12: #{tpu_custom_call.1} parent=1 // pred_region
      %s277 = ssub.s32 256, 256
      %278 = vsyncadd [#allocation4], %s277
      %s280 = sshll.u32 [#allocation5], 4
      %s281 = int_to_ptr.vmem [resolvable:$true] %s280
      %283 = dma.vmem_to_hbm [thread:$0]  %s281, 256, %s1, [#allocation4]
    $region13: #{tpu_custom_call.1} parent=1 // pred_fallthru
      _
    // Predicated region
    $region14: #{tpu_custom_call.1} parent=1 // pred_check
      _
    $region15: #{tpu_custom_call.1} parent=1 // pred_check_branch
      %285 = sbr.rel (0) target = $region17
    $region16: #{tpu_custom_call.1} parent=1 // pred_region
      %286 = dma.done [#allocation4], 256
    $region17: #{tpu_custom_call.1} parent=1 // pred_fallthru
      _
    %287 = vsyncpa [#allocation3], 1
    %288 = vsyncpa [#allocation4], 1

</llo_original>
